<compile_context>
chip_gen: v5e
topology: v5e:2x2
jax: 0.10.0
libtpu: 0.0.40
codegen_flags: <defaults>
</compile_context>

<pallas_src>
import jax
import jax.numpy as jnp
from jax import lax
from jax.experimental import pallas as pl
from jax.experimental.pallas import tpu as pltpu

TEXT_IN = 768     # sentence-transformer hidden size
IMG_IN = 2048     # resnet50 pooled feature size
EMBED = 512       # shared embedding dim
EPS_NORM = 1e-12  # WIT_NN.norm clamp eps


# ---------------------------------------------------------------------------
# Pass 1: tower head  (Linear -> Tanh -> L2 normalize), one row-tile at a time
# ---------------------------------------------------------------------------
def proj_norm_kernel(x_ref, w_ref, b_ref, o_ref):
    """x_ref: [tr, IN] bf16, w_ref: [IN, 512] bf16, b_ref: [1, 512] f32,
    o_ref: [tr, 512] bf16 (tanh'd + L2-normalized embedding tile)."""
    # bf16 operands, f32 MXU accumulation; tanh / normalize in f32.
    y = jnp.dot(x_ref[...], w_ref[...], preferred_element_type=jnp.float32)
    y = jnp.tanh(y + b_ref[...])
    # WIT_NN.norm: x / max(||x||_2, eps)  ==  x * rsqrt(max(sum_sq, eps^2))
    eps2 = EPS_NORM * EPS_NORM
    y = y * lax.rsqrt(jnp.maximum(jnp.sum(y * y, axis=1, keepdims=True), eps2))
    o_ref[...] = y.astype(o_ref.dtype)


def _project(x, w, b, *, row_tile):
    """Compute the normalized embedding for one tower: [rows, 512] bf16."""
    rows, in_dim = x.shape
    assert rows % row_tile == 0
    grid_m = rows // row_tile

    cost = pl.CostEstimate(
        flops=2 * rows * in_dim * EMBED,
        transcendentals=rows * EMBED + rows,            # tanh + rsqrt
        bytes_accessed=(x.size + w.size) * 2 + b.size * 4 + rows * EMBED * 2,
    )
    return pl.pallas_call(
        proj_norm_kernel,
        out_shape=jax.ShapeDtypeStruct((rows, EMBED), jnp.bfloat16),
        grid=(grid_m,),
        in_specs=[
            # streamed feature row tile
            pl.BlockSpec((row_tile, in_dim), lambda i: (i, 0)),
            # weight / bias: constant block index -> DMA'd once, stay resident
            pl.BlockSpec((in_dim, EMBED), lambda i: (0, 0)),
            pl.BlockSpec((1, EMBED), lambda i: (0, 0)),
        ],
        out_specs=pl.BlockSpec((row_tile, EMBED), lambda i: (i, 0)),
        compiler_params=pltpu.CompilerParams(
            dimension_semantics=("parallel",),
            vmem_limit_bytes=32 * 1024 * 1024,
        ),
        cost_estimate=cost,
    )(x, w, b)


# ---------------------------------------------------------------------------
# Pass 2: similarity matrix  sim = T @ I.T  (bf16 x bf16 -> f32 accumulation)
# ---------------------------------------------------------------------------
def sim_kernel(t_ref, i_ref, sim_ref):
    """t_ref: [tm, 512] bf16, i_ref: [tn, 512] bf16, sim_ref: [tm, tn] f32."""
    # Contraction over the last dim of both operands -> no materialized
    # transpose of the image embeddings.
    sim_ref[...] = lax.dot_general(
        t_ref[...], i_ref[...],
        dimension_numbers=(((1,), (1,)), ((), ())),
        preferred_element_type=jnp.float32)


def _sim_matmul(t_emb, i_emb, *, tm, tn):
    bm, _ = t_emb.shape
    bn, _ = i_emb.shape
    assert bm % tm == 0 and bn % tn == 0
    gm, gn = bm // tm, bn // tn

    cost = pl.CostEstimate(
        flops=2 * bm * bn * EMBED,
        transcendentals=0,
        # text tile resident across j; image embeddings re-streamed per row tile
        bytes_accessed=bm * EMBED * 2 + gm * bn * EMBED * 2 + bm * bn * 4,
    )
    return pl.pallas_call(
        sim_kernel,
        out_shape=jax.ShapeDtypeStruct((bm, bn), jnp.float32),
        grid=(gm, gn),
        in_specs=[
            pl.BlockSpec((tm, EMBED), lambda i, j: (i, 0)),
            pl.BlockSpec((tn, EMBED), lambda i, j: (j, 0)),
        ],
        out_specs=pl.BlockSpec((tm, tn), lambda i, j: (i, j)),
        compiler_params=pltpu.CompilerParams(
            dimension_semantics=("parallel", "parallel"),
            vmem_limit_bytes=32 * 1024 * 1024,
        ),
        cost_estimate=cost,
    )(t_emb, i_emb)


def _round_up(x, m):
    return ((x + m - 1) // m) * m


def wit_forward(text_feats, img_feats, params, *, tile_m=512, tile_n=512):
    """WIT head: project + tanh + L2-normalize both towers (once each), then
    a tiled sim matmul. Embeddings go through HBM as bf16 [B, 512] (tiny).

    Default 512-wide tiles feed the 256-wide MXU on v6e/v7x and stay well
    within VMEM on all generations; tiles are clamped for small batches so
    output stores remain lane-dense (128-aligned columns, 8-aligned rows).
    """
    B = text_feats.shape[0]
    assert img_feats.shape[0] == B
    wt, bt, wi, bi = params

    # bf16 features/weights halve the dominant DMA; post-MXU math stays f32.
    txt = text_feats.astype(jnp.bfloat16)
    img = img_feats.astype(jnp.bfloat16)
    wt = wt.astype(jnp.bfloat16)
    wi = wi.astype(jnp.bfloat16)
    bt = bt.astype(jnp.float32).reshape(1, EMBED)
    bi = bi.astype(jnp.float32).reshape(1, EMBED)

    # Row tiles: text rows sublane-aligned (x8); image rows become the sim
    # output's lane dimension, so keep them 128-aligned (unmasked vst).
    tm = min(tile_m, _round_up(B, 8))
    tn = min(tile_n, _round_up(B, 128))
    bm = _round_up(B, tm)
    bn = _round_up(B, tn)
    if bm != B:
        txt = jnp.pad(txt, ((0, bm - B), (0, 0)))
    if bn != B:
        img = jnp.pad(img, ((0, bn - B), (0, 0)))

    # Pass 1: each tower head computed exactly once per row.
    t_emb = _project(txt, wt, bt, row_tile=tm)   # [bm, 512] bf16
    i_emb = _project(img, wi, bi, row_tile=tn)   # [bn, 512] bf16

    # Pass 2: sim = T @ I.T, f32 output, padded region sliced off.
    sim = _sim_matmul(t_emb, i_emb, tm=tm, tn=tn)
    return sim[:B, :B]


def init_params(key):
    """Deterministic synthetic weights with the shapes WIT_NN.__init__ implies."""
    k1, k2, k3, k4 = jax.random.split(key, 4)
    wt = jax.random.normal(k1, (TEXT_IN, EMBED), jnp.float32) * (1.0 / TEXT_IN ** 0.5)
    bt = jax.random.normal(k2, (1, EMBED), jnp.float32) * 0.01
    wi = jax.random.normal(k3, (IMG_IN, EMBED), jnp.float32) * (1.0 / IMG_IN ** 0.5)
    bi = jax.random.normal(k4, (1, EMBED), jnp.float32) * 0.01
    return wt, bt, wi, bi


def reference_forward(text_feats, img_feats, params):
    """Plain-JAX f32 reference of the torch semantics (for a sanity check)."""
    wt, bt, wi, bi = params
    t = jnp.tanh(text_feats @ wt + bt)
    i = jnp.tanh(img_feats @ wi + bi)
    t = t / jnp.maximum(jnp.linalg.norm(t, axis=1, keepdims=True), EPS_NORM)
    i = i / jnp.maximum(jnp.linalg.norm(i, axis=1, keepdims=True), EPS_NORM)
    return t @ i.T


if __name__ == "__main__":
    key = jax.random.PRNGKey(0)
    k_in, k_param = jax.random.split(key)
    k_txt, k_img = jax.random.split(k_in)
    params = init_params(k_param)

    # --- small batch: single-grid-cell path ---
    B = 8
    text_feats = jax.random.normal(k_txt, (B, TEXT_IN), jnp.float32)
    img_feats = jax.random.normal(k_img, (B, IMG_IN), jnp.float32)

    sim = jax.block_until_ready(wit_forward(text_feats, img_feats, params))
    ref = reference_forward(text_feats, img_feats, params)
    assert sim.shape == (B, B)
    # bf16 features + bf16 embeddings (f32 accumulation) -> looser tolerance.
    assert jnp.allclose(sim, ref, atol=3e-2, rtol=3e-2), (
        "mismatch vs reference (max abs err = "
        f"{float(jnp.max(jnp.abs(sim - ref)))})")

    # --- modest batch, non-multiple of the tile: exercises the padded,
    #     multi-block grid path (grid=(2,2) with 128x128 sim tiles) ---
    B2 = 200
    t2 = jax.random.normal(jax.random.PRNGKey(1), (B2, TEXT_IN), jnp.float32)
    i2 = jax.random.normal(jax.random.PRNGKey(2), (B2, IMG_IN), jnp.float32)
    sim2 = jax.block_until_ready(
        wit_forward(t2, i2, params, tile_m=128, tile_n=128))
    ref2 = reference_forward(t2, i2, params)
    assert sim2.shape == (B2, B2)
    assert jnp.allclose(sim2, ref2, atol=3e-2, rtol=3e-2), (
        "mismatch vs reference (tiled path, max abs err = "
        f"{float(jnp.max(jnp.abs(sim2 - ref2)))})")

    print("KERNEL_OK")
</pallas_src>

<mosaic_0001>
module attributes {stable_mosaic.version = 11 : i64} {
  func.func @proj_norm_kernel(%arg0: i32, %arg1: memref<8x768xbf16, #tpu.memory_space<vmem>>, %arg2: memref<768x512xbf16, #tpu.memory_space<vmem>>, %arg3: memref<1x512xf32, #tpu.memory_space<vmem>>, %arg4: memref<8x512xbf16, #tpu.memory_space<vmem>>) attributes {dimension_semantics = [#tpu.dimension_semantics<parallel>], iteration_bounds = array<i64: 1>, scalar_prefetch = 0 : i64, scratch_operands = 0 : i64, tpu.core_type = #tpu.core_type<tc>, window_params = [{transform_indices = @transform_0, window_bounds = array<i64: 8, 768>}, {pipeline_mode = #tpu.pipeline_mode<synchronous>, transform_indices = @transform_1, window_bounds = array<i64: 768, 512>}, {pipeline_mode = #tpu.pipeline_mode<synchronous>, transform_indices = @transform_2, window_bounds = array<i64: 1, 512>}, {transform_indices = @transform_3, window_bounds = array<i64: 8, 512>}]} {
    %c0 = arith.constant 0 : index
    %c0_0 = arith.constant 0 : index
    %0 = vector.load %arg1[%c0, %c0_0] : memref<8x768xbf16, #tpu.memory_space<vmem>>, vector<8x768xbf16>
    %c0_1 = arith.constant 0 : index
    %c0_2 = arith.constant 0 : index
    %1 = vector.load %arg2[%c0_1, %c0_2] : memref<768x512xbf16, #tpu.memory_space<vmem>>, vector<768x512xbf16>
    %cst = arith.constant dense<0.000000e+00> : vector<8x512xf32>
    %2 = tpu.matmul %0, %1, %cst {dimension_numbers = #tpu.dot_dimension_numbers<[1], [0], [0], [1], [0, 0, 1, 1], [], []>} : vector<8x768xbf16>, vector<768x512xbf16>, vector<8x512xf32> -> vector<8x512xf32>
    %c0_3 = arith.constant 0 : index
    %c0_4 = arith.constant 0 : index
    %3 = vector.load %arg3[%c0_3, %c0_4] : memref<1x512xf32, #tpu.memory_space<vmem>>, vector<1x512xf32>
    %4 = vector.broadcast %3 : vector<1x512xf32> to vector<8x512xf32>
    %5 = arith.addf %2, %4 : vector<8x512xf32>
    %6 = math.tanh %5 : vector<8x512xf32>
    %7 = arith.mulf %6, %6 : vector<8x512xf32>
    %cst_5 = arith.constant dense<0.000000e+00> : vector<8xf32>
    %8 = vector.multi_reduction <add>, %7, %cst_5 [1] : vector<8x512xf32> to vector<8xf32>
    %9 = vector.shape_cast %8 : vector<8xf32> to vector<8x1xf32>
    %cst_6 = arith.constant 1.000000e-24 : f32
    %10 = vector.broadcast %cst_6 : f32 to vector<8x1xf32>
    %11 = arith.maximumf %9, %10 : vector<8x1xf32>
    %12 = math.rsqrt %11 : vector<8x1xf32>
    %13 = vector.broadcast %12 : vector<8x1xf32> to vector<8x512xf32>
    %14 = arith.mulf %6, %13 : vector<8x512xf32>
    %15 = arith.truncf %14 : vector<8x512xf32> to vector<8x512xbf16>
    %c0_7 = arith.constant 0 : index
    %c0_8 = arith.constant 0 : index
    %16 = vector.load %arg4[%c0_7, %c0_8] : memref<8x512xbf16, #tpu.memory_space<vmem>>, vector<8x512xbf16>
    tpu.vector_store %arg4[%c0_7, %c0_8], %15 {strides = array<i32>} : memref<8x512xbf16, #tpu.memory_space<vmem>>, vector<8x512xbf16>,
    return
  }
  func.func @transform_0(%arg0: i32) -> (i32, i32) {
    %c0_i32 = arith.constant 0 : i32
    %c0_i32_0 = arith.constant 0 : i32
    return %arg0, %c0_i32 : i32, i32
  }
  func.func @transform_1(%arg0: i32) -> (i32, i32) {
    %c0_i32 = arith.constant 0 : i32
    %c0_i32_0 = arith.constant 0 : i32
    %c0_i32_1 = arith.constant 0 : i32
    return %c0_i32, %c0_i32_0 : i32, i32
  }
  func.func @transform_2(%arg0: i32) -> (i32, i32) {
    %c0_i32 = arith.constant 0 : i32
    %c0_i32_0 = arith.constant 0 : i32
    %c0_i32_1 = arith.constant 0 : i32
    return %c0_i32, %c0_i32_0 : i32, i32
  }
  func.func @transform_3(%arg0: i32) -> (i32, i32) {
    %c0_i32 = arith.constant 0 : i32
    %c0_i32_0 = arith.constant 0 : i32
    return %arg0, %c0_i32 : i32, i32
  }
}

</mosaic_0001>

<llo_original>
// kernel: tpu_custom_call.1
$region0: #{tpu_custom_call.1}
  #allocation0 [shape = 'u32[]', space=smem, size = 0x4, offset = 0x4, fixed_abs, tag = 'smem constant byte address 0x4 - core index']
  #allocation1 [shape = 'u32[72,128]{1,0:T(1,128)}', space=vmem, size = 0x9000, scoped, tag = 'internal scratch']
  %s0 = inlined_call_operand.hbm [shape: bf16[8,768], index: 0, kind: input, shape index: {}]
  %s1 = inlined_call_operand.hbm [shape: bf16[768,512], index: 1, kind: input, shape index: {}]
  %s2 = inlined_call_operand.hbm [shape: f32[1,512], index: 2, kind: input, shape index: {}]
  %s3 = inlined_call_operand.hbm [shape: bf16[8,512], index: 3, kind: output, shape index: {}]
  %s4 = sld [smem:[#allocation0]]
  $region34: #{tpu_custom_call.1} parent=0
    _
  %s6 = ssub.s32 1, %s4
  %s7 = scalar_select 0, %s6, %s4
  $region1: #{tpu_custom_call.1} parent=0
    #allocation2 [shape = 'u8[12288]{0}', space=vmem, size = 0x3000, scoped, tag = 'input window, operand 0, single buffered']
    #allocation3 [shape = 's32[1]{0}', space=sflag, size = 0x4, scoped, tag = 'scoped memory for tpu_custom_call.1']
    #allocation4 [shape = 's32[1]{0}', space=sflag, size = 0x4, scoped, tag = 'scoped memory for tpu_custom_call.1']
    #allocation5 [shape = 'u8[786432]{0}', space=vmem, size = 0xc0000, scoped, tag = 'input window, operand 1, single buffered']
    #allocation6 [shape = 's32[1]{0}', space=sflag, size = 0x4, scoped, tag = 'scoped memory for tpu_custom_call.1']
    #allocation7 [shape = 'u8[2048]{0}', space=vmem, size = 0x800, scoped, tag = 'input window, operand 2, single buffered']
    #allocation8 [shape = 'u8[8192]{0}', space=vmem, size = 0x2000, scoped, tag = 'output window, operand 0, single buffered']
    %8 = vsyncpa [#allocation3], 0
    %9 = vsyncpa [#allocation6], 0
    %10 = vsyncpa [#allocation4], 0
    // Predicated region
    $region2: #{tpu_custom_call.1} parent=1 // pred_check
      _
    $region3: #{tpu_custom_call.1} parent=1 // pred_check_branch
      %12 = sbr.rel (0) target = $region5
    $region4: #{tpu_custom_call.1} parent=1 // pred_region
      %14 = vsyncadd [#allocation3], 0
      %s16 = sshll.u32 %s0, 4
      %s17 = int_to_ptr.hbm [resolvable:$true] %s16
      %s18 = sshll.u32 [#allocation2], 4
      %s19 = int_to_ptr.vmem [resolvable:$true] %s18
      %21 = dma.hbm_to_vmem [thread:$0]  %s17, 384, %s19, [#allocation3]
    $region5: #{tpu_custom_call.1} parent=1 // pred_fallthru
      _
    // Predicated region
    $region6: #{tpu_custom_call.1} parent=1 // pred_check
      _
    $region7: #{tpu_custom_call.1} parent=1 // pred_check_branch
      %23 = sbr.rel (0) target = $region9
    $region8: #{tpu_custom_call.1} parent=1 // pred_region
      %25 = vsyncadd [#allocation6], 0
      %s26 = sshll.u32 %s1, 4
      %s27 = int_to_ptr.hbm [resolvable:$true] %s26
      %s28 = sshll.u32 [#allocation5], 4
      %s29 = int_to_ptr.vmem [resolvable:$true] %s28
      %34 = dma.hbm_to_vmem [thread:$0]  %s27, 24576, %s29, [#allocation6], 256, 256, 16
    $region9: #{tpu_custom_call.1} parent=1 // pred_fallthru
      _
    // Predicated region
    $region10: #{tpu_custom_call.1} parent=1 // pred_check
      _
    $region11: #{tpu_custom_call.1} parent=1 // pred_check_branch
      %36 = sbr.rel (0) target = $region13
    $region12: #{tpu_custom_call.1} parent=1 // pred_region
      %38 = vsyncadd [#allocation6], 0
      %s40 = sshll.u32 %s2, 4
      %s41 = int_to_ptr.hbm [resolvable:$true] %s40
      %s42 = sshll.u32 [#allocation7], 4
      %s43 = int_to_ptr.vmem [resolvable:$true] %s42
      %45 = dma.hbm_to_vmem [thread:$0]  %s41, 64, %s43, [#allocation6]
    $region13: #{tpu_custom_call.1} parent=1 // pred_fallthru
      _
    // Predicated region
    $region14: #{tpu_custom_call.1} parent=1 // pred_check
      _
    $region15: #{tpu_custom_call.1} parent=1 // pred_check_branch
      %47 = sbr.rel (0) target = $region17
    $region16: #{tpu_custom_call.1} parent=1 // pred_region
      %49 = dma.done [#allocation3], 384
    $region17: #{tpu_custom_call.1} parent=1 // pred_fallthru
      _
    // Predicated region
    $region18: #{tpu_custom_call.1} parent=1 // pred_check
      _
    $region19: #{tpu_custom_call.1} parent=1 // pred_check_branch
      %51 = sbr.rel (0) target = $region21
    $region20: #{tpu_custom_call.1} parent=1 // pred_region
      %53 = dma.done [#allocation6], 24576
    $region21: #{tpu_custom_call.1} parent=1 // pred_fallthru
      _
    // Predicated region
    $region22: #{tpu_custom_call.1} parent=1 // pred_check
      _
    $region23: #{tpu_custom_call.1} parent=1 // pred_check_branch
      %55 = sbr.rel (0) target = $region25
    $region24: #{tpu_custom_call.1} parent=1 // pred_region
      %57 = dma.done [#allocation6], 64
    $region25: #{tpu_custom_call.1} parent=1 // pred_fallthru
      _
    %v58 = vld [vmem:[#allocation2] sm:$0xff]
    %v59 = vld [vmem:[#allocation2 + $0x8] sm:$0xff]
    %v60 = vld [vmem:[#allocation2 + $0x10] sm:$0xff]
    %v61 = vld [vmem:[#allocation5] sm:$0xff]
    %v62 = vld [vmem:[#allocation5 + $0x8] sm:$0xff]
    %v63 = vld [vmem:[#allocation5 + $0x10] sm:$0xff]
    %v64 = vld [vmem:[#allocation5 + $0x18] sm:$0xff]
    %v65 = vld [vmem:[#allocation5 + $0x20] sm:$0xff]
    %v66 = vld [vmem:[#allocation5 + $0x28] sm:$0xff]
    %v67 = vld [vmem:[#allocation5 + $0x30] sm:$0xff]
    %v68 = vld [vmem:[#allocation5 + $0x38] sm:$0xff]
    %v69 = vld [vmem:[#allocation5 + $0x40] sm:$0xff]
    %v70 = vld [vmem:[#allocation5 + $0x48] sm:$0xff]
    %v71 = vld [vmem:[#allocation5 + $0x50] sm:$0xff]
    %v72 = vld [vmem:[#allocation5 + $0x58] sm:$0xff]
    %v73 = vld [vmem:[#allocation5 + $0x60] sm:$0xff]
    %v74 = vld [vmem:[#allocation5 + $0x68] sm:$0xff]
    %v75 = vld [vmem:[#allocation5 + $0x70] sm:$0xff]
    %v76 = vld [vmem:[#allocation5 + $0x78] sm:$0xff]
    %v77 = vld [vmem:[#allocation5 + $0x80] sm:$0xff]
    %v78 = vld [vmem:[#allocation5 + $0x88] sm:$0xff]
    %v79 = vld [vmem:[#allocation5 + $0x90] sm:$0xff]
    %v80 = vld [vmem:[#allocation5 + $0x98] sm:$0xff]
    %v81 = vld [vmem:[#allocation5 + $0xa0] sm:$0xff]
    %v82 = vld [vmem:[#allocation5 + $0xa8] sm:$0xff]
    %v83 = vld [vmem:[#allocation5 + $0xb0] sm:$0xff]
    %v84 = vld [vmem:[#allocation5 + $0xb8] sm:$0xff]
    %v85 = vld [vmem:[#allocation5 + $0xc0] sm:$0xff]
    %v86 = vld [vmem:[#allocation5 + $0xc8] sm:$0xff]
    %v87 = vld [vmem:[#allocation5 + $0xd0] sm:$0xff]
    %v88 = vld [vmem:[#allocation5 + $0xd8] sm:$0xff]
    %v89 = vld [vmem:[#allocation5 + $0xe0] sm:$0xff]
    %v90 = vld [vmem:[#allocation5 + $0xe8] sm:$0xff]
    %v91 = vld [vmem:[#allocation5 + $0xf0] sm:$0xff]
    %v92 = vld [vmem:[#allocation5 + $0xf8] sm:$0xff]
    %v93 = vld [vmem:[#allocation5 + $0x100] sm:$0xff]
    %v94 = vld [vmem:[#allocation5 + $0x108] sm:$0xff]
    %v95 = vld [vmem:[#allocation5 + $0x110] sm:$0xff]
    %v96 = vld [vmem:[#allocation5 + $0x118] sm:$0xff]
    %v97 = vld [vmem:[#allocation5 + $0x120] sm:$0xff]
    %v98 = vld [vmem:[#allocation5 + $0x128] sm:$0xff]
    %v99 = vld [vmem:[#allocation5 + $0x130] sm:$0xff]
    %v100 = vld [vmem:[#allocation5 + $0x138] sm:$0xff]
    %v101 = vld [vmem:[#allocation5 + $0x140] sm:$0xff]
    %v102 = vld [vmem:[#allocation5 + $0x148] sm:$0xff]
    %v103 = vld [vmem:[#allocation5 + $0x150] sm:$0xff]
    %v104 = vld [vmem:[#allocation5 + $0x158] sm:$0xff]
    %v105 = vld [vmem:[#allocation5 + $0x160] sm:$0xff]
    %v106 = vld [vmem:[#allocation5 + $0x168] sm:$0xff]
    %v107 = vld [vmem:[#allocation5 + $0x170] sm:$0xff]
    %v108 = vld [vmem:[#allocation5 + $0x178] sm:$0xff]
    %v109 = vld [vmem:[#allocation5 + $0x180] sm:$0xff]
    %v110 = vld [vmem:[#allocation5 + $0x188] sm:$0xff]
    %v111 = vld [vmem:[#allocation5 + $0x190] sm:$0xff]
    %v112 = vld [vmem:[#allocation5 + $0x198] sm:$0xff]
    %v113 = vld [vmem:[#allocation5 + $0x1a0] sm:$0xff]
    %v114 = vld [vmem:[#allocation5 + $0x1a8] sm:$0xff]
    %v115 = vld [vmem:[#allocation5 + $0x1b0] sm:$0xff]
    %v116 = vld [vmem:[#allocation5 + $0x1b8] sm:$0xff]
    %v117 = vld [vmem:[#allocation5 + $0x1c0] sm:$0xff]
    %v118 = vld [vmem:[#allocation5 + $0x1c8] sm:$0xff]
    %v119 = vld [vmem:[#allocation5 + $0x1d0] sm:$0xff]
    %v120 = vld [vmem:[#allocation5 + $0x1d8] sm:$0xff]
    %v121 = vld [vmem:[#allocation5 + $0x1e0] sm:$0xff]
    %v122 = vld [vmem:[#allocation5 + $0x1e8] sm:$0xff]
    %v123 = vld [vmem:[#allocation5 + $0x1f0] sm:$0xff]
    %v124 = vld [vmem:[#allocation5 + $0x1f8] sm:$0xff]
    %v125 = vld [vmem:[#allocation5 + $0x200] sm:$0xff]
    %v126 = vld [vmem:[#allocation5 + $0x208] sm:$0xff]
    %v127 = vld [vmem:[#allocation5 + $0x210] sm:$0xff]
    %v128 = vld [vmem:[#allocation5 + $0x218] sm:$0xff]
    %v129 = vld [vmem:[#allocation5 + $0x220] sm:$0xff]
    %v130 = vld [vmem:[#allocation5 + $0x228] sm:$0xff]
    %v131 = vld [vmem:[#allocation5 + $0x230] sm:$0xff]
    %v132 = vld [vmem:[#allocation5 + $0x238] sm:$0xff]
    %v133 = vld [vmem:[#allocation5 + $0x240] sm:$0xff]
    %v134 = vld [vmem:[#allocation5 + $0x248] sm:$0xff]
    %v135 = vld [vmem:[#allocation5 + $0x250] sm:$0xff]
    %v136 = vld [vmem:[#allocation5 + $0x258] sm:$0xff]
    %v137 = vld [vmem:[#allocation5 + $0x260] sm:$0xff]
    %v138 = vld [vmem:[#allocation5 + $0x268] sm:$0xff]
    %v139 = vld [vmem:[#allocation5 + $0x270] sm:$0xff]
    %v140 = vld [vmem:[#allocation5 + $0x278] sm:$0xff]
    %v141 = vld [vmem:[#allocation5 + $0x280] sm:$0xff]
    %v142 = vld [vmem:[#allocation5 + $0x288] sm:$0xff]
    %v143 = vld [vmem:[#allocation5 + $0x290] sm:$0xff]
    %v144 = vld [vmem:[#allocation5 + $0x298] sm:$0xff]
    %v145 = vld [vmem:[#allocation5 + $0x2a0] sm:$0xff]
    %v146 = vld [vmem:[#allocation5 + $0x2a8] sm:$0xff]
    %v147 = vld [vmem:[#allocation5 + $0x2b0] sm:$0xff]
    %v148 = vld [vmem:[#allocation5 + $0x2b8] sm:$0xff]
    %v149 = vld [vmem:[#allocation5 + $0x2c0] sm:$0xff]
    %v150 = vld [vmem:[#allocation5 + $0x2c8] sm:$0xff]
    %v151 = vld [vmem:[#allocation5 + $0x2d0] sm:$0xff]
    %v152 = vld [vmem:[#allocation5 + $0x2d8] sm:$0xff]
    %v153 = vld [vmem:[#allocation5 + $0x2e0] sm:$0xff]
    %v154 = vld [vmem:[#allocation5 + $0x2e8] sm:$0xff]
    %v155 = vld [vmem:[#allocation5 + $0x2f0] sm:$0xff]
    %v156 = vld [vmem:[#allocation5 + $0x2f8] sm:$0xff]
    %v157 = vld [vmem:[#allocation5 + $0x300] sm:$0xff]
    %v158 = vld [vmem:[#allocation5 + $0x308] sm:$0xff]
    %v159 = vld [vmem:[#allocation5 + $0x310] sm:$0xff]
    %v160 = vld [vmem:[#allocation5 + $0x318] sm:$0xff]
    %v161 = vld [vmem:[#allocation5 + $0x320] sm:$0xff]
    %v162 = vld [vmem:[#allocation5 + $0x328] sm:$0xff]
    %v163 = vld [vmem:[#allocation5 + $0x330] sm:$0xff]
    %v164 = vld [vmem:[#allocation5 + $0x338] sm:$0xff]
    %v165 = vld [vmem:[#allocation5 + $0x340] sm:$0xff]
    %v166 = vld [vmem:[#allocation5 + $0x348] sm:$0xff]
    %v167 = vld [vmem:[#allocation5 + $0x350] sm:$0xff]
    %v168 = vld [vmem:[#allocation5 + $0x358] sm:$0xff]
    %v169 = vld [vmem:[#allocation5 + $0x360] sm:$0xff]
    %v170 = vld [vmem:[#allocation5 + $0x368] sm:$0xff]
    %v171 = vld [vmem:[#allocation5 + $0x370] sm:$0xff]
    %v172 = vld [vmem:[#allocation5 + $0x378] sm:$0xff]
    %v173 = vld [vmem:[#allocation5 + $0x380] sm:$0xff]
    %v174 = vld [vmem:[#allocation5 + $0x388] sm:$0xff]
    %v175 = vld [vmem:[#allocation5 + $0x390] sm:$0xff]
    %v176 = vld [vmem:[#allocation5 + $0x398] sm:$0xff]
    %v177 = vld [vmem:[#allocation5 + $0x3a0] sm:$0xff]
    %v178 = vld [vmem:[#allocation5 + $0x3a8] sm:$0xff]
    %v179 = vld [vmem:[#allocation5 + $0x3b0] sm:$0xff]
    %v180 = vld [vmem:[#allocation5 + $0x3b8] sm:$0xff]
    %v181 = vld [vmem:[#allocation5 + $0x3c0] sm:$0xff]
    %v182 = vld [vmem:[#allocation5 + $0x3c8] sm:$0xff]
    %v183 = vld [vmem:[#allocation5 + $0x3d0] sm:$0xff]
    %v184 = vld [vmem:[#allocation5 + $0x3d8] sm:$0xff]
    %v185 = vld [vmem:[#allocation5 + $0x3e0] sm:$0xff]
    %v186 = vld [vmem:[#allocation5 + $0x3e8] sm:$0xff]
    %v187 = vld [vmem:[#allocation5 + $0x3f0] sm:$0xff]
    %v188 = vld [vmem:[#allocation5 + $0x3f8] sm:$0xff]
    %v189 = vld [vmem:[#allocation5 + $0x400] sm:$0xff]
    %v190 = vld [vmem:[#allocation5 + $0x408] sm:$0xff]
    %v191 = vld [vmem:[#allocation5 + $0x410] sm:$0xff]
    %v192 = vld [vmem:[#allocation5 + $0x418] sm:$0xff]
    %v193 = vld [vmem:[#allocation5 + $0x420] sm:$0xff]
    %v194 = vld [vmem:[#allocation5 + $0x428] sm:$0xff]
    %v195 = vld [vmem:[#allocation5 + $0x430] sm:$0xff]
    %v196 = vld [vmem:[#allocation5 + $0x438] sm:$0xff]
    %v197 = vld [vmem:[#allocation5 + $0x440] sm:$0xff]
    %v198 = vld [vmem:[#allocation5 + $0x448] sm:$0xff]
    %v199 = vld [vmem:[#allocation5 + $0x450] sm:$0xff]
    %v200 = vld [vmem:[#allocation5 + $0x458] sm:$0xff]
    %v201 = vld [vmem:[#allocation5 + $0x460] sm:$0xff]
    %v202 = vld [vmem:[#allocation5 + $0x468] sm:$0xff]
    %v203 = vld [vmem:[#allocation5 + $0x470] sm:$0xff]
    %v204 = vld [vmem:[#allocation5 + $0x478] sm:$0xff]
    %v205 = vld [vmem:[#allocation5 + $0x480] sm:$0xff]
    %v206 = vld [vmem:[#allocation5 + $0x488] sm:$0xff]
    %v207 = vld [vmem:[#allocation5 + $0x490] sm:$0xff]
    %v208 = vld [vmem:[#allocation5 + $0x498] sm:$0xff]
    %v209 = vld [vmem:[#allocation5 + $0x4a0] sm:$0xff]
    %v210 = vld [vmem:[#allocation5 + $0x4a8] sm:$0xff]
    %v211 = vld [vmem:[#allocation5 + $0x4b0] sm:$0xff]
    %v212 = vld [vmem:[#allocation5 + $0x4b8] sm:$0xff]
    %v213 = vld [vmem:[#allocation5 + $0x4c0] sm:$0xff]
    %v214 = vld [vmem:[#allocation5 + $0x4c8] sm:$0xff]
    %v215 = vld [vmem:[#allocation5 + $0x4d0] sm:$0xff]
    %v216 = vld [vmem:[#allocation5 + $0x4d8] sm:$0xff]
    %v217 = vld [vmem:[#allocation5 + $0x4e0] sm:$0xff]
    %v218 = vld [vmem:[#allocation5 + $0x4e8] sm:$0xff]
    %v219 = vld [vmem:[#allocation5 + $0x4f0] sm:$0xff]
    %v220 = vld [vmem:[#allocation5 + $0x4f8] sm:$0xff]
    %v221 = vld [vmem:[#allocation5 + $0x500] sm:$0xff]
    %v222 = vld [vmem:[#allocation5 + $0x508] sm:$0xff]
    %v223 = vld [vmem:[#allocation5 + $0x510] sm:$0xff]
    %v224 = vld [vmem:[#allocation5 + $0x518] sm:$0xff]
    %v225 = vld [vmem:[#allocation5 + $0x520] sm:$0xff]
    %v226 = vld [vmem:[#allocation5 + $0x528] sm:$0xff]
    %v227 = vld [vmem:[#allocation5 + $0x530] sm:$0xff]
    %v228 = vld [vmem:[#allocation5 + $0x538] sm:$0xff]
    %v229 = vld [vmem:[#allocation5 + $0x540] sm:$0xff]
    %v230 = vld [vmem:[#allocation5 + $0x548] sm:$0xff]
    %v231 = vld [vmem:[#allocation5 + $0x550] sm:$0xff]
    %v232 = vld [vmem:[#allocation5 + $0x558] sm:$0xff]
    %v233 = vld [vmem:[#allocation5 + $0x560] sm:$0xff]
    %v234 = vld [vmem:[#allocation5 + $0x568] sm:$0xff]
    %v235 = vld [vmem:[#allocation5 + $0x570] sm:$0xff]
    %v236 = vld [vmem:[#allocation5 + $0x578] sm:$0xff]
    %v237 = vld [vmem:[#allocation5 + $0x580] sm:$0xff]
    %v238 = vld [vmem:[#allocation5 + $0x588] sm:$0xff]
    %v239 = vld [vmem:[#allocation5 + $0x590] sm:$0xff]
    %v240 = vld [vmem:[#allocation5 + $0x598] sm:$0xff]
    %v241 = vld [vmem:[#allocation5 + $0x5a0] sm:$0xff]
    %v242 = vld [vmem:[#allocation5 + $0x5a8] sm:$0xff]
    %v243 = vld [vmem:[#allocation5 + $0x5b0] sm:$0xff]
    %v244 = vld [vmem:[#allocation5 + $0x5b8] sm:$0xff]
    %v245 = vld [vmem:[#allocation5 + $0x5c0] sm:$0xff]
    %v246 = vld [vmem:[#allocation5 + $0x5c8] sm:$0xff]
    %v247 = vld [vmem:[#allocation5 + $0x5d0] sm:$0xff]
    %v248 = vld [vmem:[#allocation5 + $0x5d8] sm:$0xff]
    %v249 = vld [vmem:[#allocation5 + $0x5e0] sm:$0xff]
    %v250 = vld [vmem:[#allocation5 + $0x5e8] sm:$0xff]
    %v251 = vld [vmem:[#allocation5 + $0x5f0] sm:$0xff]
    %v252 = vld [vmem:[#allocation5 + $0x5f8] sm:$0xff]
    %v253 = vld [vmem:[#allocation7] sm:$0xf]
    %v255 = vperm.slane %v253, 0
    %v256 = vperm.slane %v253, 1
    %v257 = vperm.slane %v253, 2
    %v258 = vperm.slane %v253, 3
    %v266 = vunpack.c.l.b16 %v58
    %v267 = vunpack.c.h.b16 %v58
    %v268 = vunpack.c.l.b16 %v59
    %v269 = vunpack.c.h.b16 %v59
    %v270 = vunpack.c.l.b16 %v60
    %v271 = vunpack.c.h.b16 %v60
    %v272 = vpack.c.b16 %v266, %v266
    %v273 = vpack.c.b16 %v267, %v267
    %v274 = vpack.c.b16 %v268, %v268
    %v275 = vpack.c.b16 %v269, %v269
    %v276 = vpack.c.b16 %v270, %v270
    %v277 = vpack.c.b16 %v271, %v271
    %v476 = vunpack.c.l.b16 %v61
    %v477 = vunpack.c.h.b16 %v61
    %v478 = vunpack.c.l.b16 %v62
    %v479 = vunpack.c.h.b16 %v62
    %v480 = vunpack.c.l.b16 %v63
    %v481 = vunpack.c.h.b16 %v63
    %v482 = vunpack.c.l.b16 %v64
    %v483 = vunpack.c.h.b16 %v64
    %v484 = vunpack.c.l.b16 %v65
    %v485 = vunpack.c.h.b16 %v65
    %v486 = vunpack.c.l.b16 %v66
    %v487 = vunpack.c.h.b16 %v66
    %v488 = vunpack.c.l.b16 %v67
    %v489 = vunpack.c.h.b16 %v67
    %v490 = vunpack.c.l.b16 %v68
    %v491 = vunpack.c.h.b16 %v68
    %v492 = vunpack.c.l.b16 %v69
    %v493 = vunpack.c.h.b16 %v69
    %v494 = vunpack.c.l.b16 %v70
    %v495 = vunpack.c.h.b16 %v70
    %v496 = vunpack.c.l.b16 %v71
    %v497 = vunpack.c.h.b16 %v71
    %v498 = vunpack.c.l.b16 %v72
    %v499 = vunpack.c.h.b16 %v72
    %v500 = vunpack.c.l.b16 %v73
    %v501 = vunpack.c.h.b16 %v73
    %v502 = vunpack.c.l.b16 %v74
    %v503 = vunpack.c.h.b16 %v74
    %v504 = vunpack.c.l.b16 %v75
    %v505 = vunpack.c.h.b16 %v75
    %v506 = vunpack.c.l.b16 %v76
    %v507 = vunpack.c.h.b16 %v76
    %v508 = vunpack.c.l.b16 %v77
    %v509 = vunpack.c.h.b16 %v77
    %v510 = vunpack.c.l.b16 %v78
    %v511 = vunpack.c.h.b16 %v78
    %v512 = vunpack.c.l.b16 %v79
    %v513 = vunpack.c.h.b16 %v79
    %v514 = vunpack.c.l.b16 %v80
    %v515 = vunpack.c.h.b16 %v80
    %v516 = vunpack.c.l.b16 %v81
    %v517 = vunpack.c.h.b16 %v81
    %v518 = vunpack.c.l.b16 %v82
    %v519 = vunpack.c.h.b16 %v82
    %v520 = vunpack.c.l.b16 %v83
    %v521 = vunpack.c.h.b16 %v83
    %v522 = vunpack.c.l.b16 %v84
    %v523 = vunpack.c.h.b16 %v84
    %v524 = vunpack.c.l.b16 %v85
    %v525 = vunpack.c.h.b16 %v85
    %v526 = vunpack.c.l.b16 %v86
    %v527 = vunpack.c.h.b16 %v86
    %v528 = vunpack.c.l.b16 %v87
    %v529 = vunpack.c.h.b16 %v87
    %v530 = vunpack.c.l.b16 %v88
    %v531 = vunpack.c.h.b16 %v88
    %v532 = vunpack.c.l.b16 %v89
    %v533 = vunpack.c.h.b16 %v89
    %v534 = vunpack.c.l.b16 %v90
    %v535 = vunpack.c.h.b16 %v90
    %v536 = vunpack.c.l.b16 %v91
    %v537 = vunpack.c.h.b16 %v91
    %v538 = vunpack.c.l.b16 %v92
    %v539 = vunpack.c.h.b16 %v92
    %v540 = vunpack.c.l.b16 %v93
    %v541 = vunpack.c.h.b16 %v93
    %v542 = vunpack.c.l.b16 %v94
    %v543 = vunpack.c.h.b16 %v94
    %v544 = vunpack.c.l.b16 %v95
    %v545 = vunpack.c.h.b16 %v95
    %v546 = vunpack.c.l.b16 %v96
    %v547 = vunpack.c.h.b16 %v96
    %v548 = vunpack.c.l.b16 %v97
    %v549 = vunpack.c.h.b16 %v97
    %v550 = vunpack.c.l.b16 %v98
    %v551 = vunpack.c.h.b16 %v98
    %v552 = vunpack.c.l.b16 %v99
    %v553 = vunpack.c.h.b16 %v99
    %v554 = vunpack.c.l.b16 %v100
    %v555 = vunpack.c.h.b16 %v100
    %v556 = vunpack.c.l.b16 %v101
    %v557 = vunpack.c.h.b16 %v101
    %v558 = vunpack.c.l.b16 %v102
    %v559 = vunpack.c.h.b16 %v102
    %v560 = vunpack.c.l.b16 %v103
    %v561 = vunpack.c.h.b16 %v103
    %v562 = vunpack.c.l.b16 %v104
    %v563 = vunpack.c.h.b16 %v104
    %v564 = vunpack.c.l.b16 %v105
    %v565 = vunpack.c.h.b16 %v105
    %v566 = vunpack.c.l.b16 %v106
    %v567 = vunpack.c.h.b16 %v106
    %v568 = vunpack.c.l.b16 %v107
    %v569 = vunpack.c.h.b16 %v107
    %v570 = vunpack.c.l.b16 %v108
    %v571 = vunpack.c.h.b16 %v108
    %v572 = vunpack.c.l.b16 %v109
    %v573 = vunpack.c.h.b16 %v109
    %v574 = vunpack.c.l.b16 %v110
    %v575 = vunpack.c.h.b16 %v110
    %v576 = vunpack.c.l.b16 %v111
    %v577 = vunpack.c.h.b16 %v111
    %v578 = vunpack.c.l.b16 %v112
    %v579 = vunpack.c.h.b16 %v112
    %v580 = vunpack.c.l.b16 %v113
    %v581 = vunpack.c.h.b16 %v113
    %v582 = vunpack.c.l.b16 %v114
    %v583 = vunpack.c.h.b16 %v114
    %v584 = vunpack.c.l.b16 %v115
    %v585 = vunpack.c.h.b16 %v115
    %v586 = vunpack.c.l.b16 %v116
    %v587 = vunpack.c.h.b16 %v116
    %v588 = vunpack.c.l.b16 %v117
    %v589 = vunpack.c.h.b16 %v117
    %v590 = vunpack.c.l.b16 %v118
    %v591 = vunpack.c.h.b16 %v118
    %v592 = vunpack.c.l.b16 %v119
    %v593 = vunpack.c.h.b16 %v119
    %v594 = vunpack.c.l.b16 %v120
    %v595 = vunpack.c.h.b16 %v120
    %v596 = vunpack.c.l.b16 %v121
    %v597 = vunpack.c.h.b16 %v121
    %v598 = vunpack.c.l.b16 %v122
    %v599 = vunpack.c.h.b16 %v122
    %v600 = vunpack.c.l.b16 %v123
    %v601 = vunpack.c.h.b16 %v123
    %v602 = vunpack.c.l.b16 %v124
    %v603 = vunpack.c.h.b16 %v124
    %v604 = vunpack.c.l.b16 %v125
    %v605 = vunpack.c.h.b16 %v125
    %v606 = vunpack.c.l.b16 %v126
    %v607 = vunpack.c.h.b16 %v126
    %v608 = vunpack.c.l.b16 %v127
    %v609 = vunpack.c.h.b16 %v127
    %v610 = vunpack.c.l.b16 %v128
    %v611 = vunpack.c.h.b16 %v128
    %v612 = vunpack.c.l.b16 %v129
    %v613 = vunpack.c.h.b16 %v129
    %v614 = vunpack.c.l.b16 %v130
    %v615 = vunpack.c.h.b16 %v130
    %v616 = vunpack.c.l.b16 %v131
    %v617 = vunpack.c.h.b16 %v131
    %v618 = vunpack.c.l.b16 %v132
    %v619 = vunpack.c.h.b16 %v132
    %v620 = vunpack.c.l.b16 %v133
    %v621 = vunpack.c.h.b16 %v133
    %v622 = vunpack.c.l.b16 %v134
    %v623 = vunpack.c.h.b16 %v134
    %v624 = vunpack.c.l.b16 %v135
    %v625 = vunpack.c.h.b16 %v135
    %v626 = vunpack.c.l.b16 %v136
    %v627 = vunpack.c.h.b16 %v136
    %v628 = vunpack.c.l.b16 %v137
    %v629 = vunpack.c.h.b16 %v137
    %v630 = vunpack.c.l.b16 %v138
    %v631 = vunpack.c.h.b16 %v138
    %v632 = vunpack.c.l.b16 %v139
    %v633 = vunpack.c.h.b16 %v139
    %v634 = vunpack.c.l.b16 %v140
    %v635 = vunpack.c.h.b16 %v140
    %v636 = vunpack.c.l.b16 %v141
    %v637 = vunpack.c.h.b16 %v141
    %v638 = vunpack.c.l.b16 %v142
    %v639 = vunpack.c.h.b16 %v142
    %v640 = vunpack.c.l.b16 %v143
    %v641 = vunpack.c.h.b16 %v143
    %v642 = vunpack.c.l.b16 %v144
    %v643 = vunpack.c.h.b16 %v144
    %v644 = vunpack.c.l.b16 %v145
    %v645 = vunpack.c.h.b16 %v145
    %v646 = vunpack.c.l.b16 %v146
    %v647 = vunpack.c.h.b16 %v146
    %v648 = vunpack.c.l.b16 %v147
    %v649 = vunpack.c.h.b16 %v147
    %v650 = vunpack.c.l.b16 %v148
    %v651 = vunpack.c.h.b16 %v148
    %v652 = vunpack.c.l.b16 %v149
    %v653 = vunpack.c.h.b16 %v149
    %v654 = vunpack.c.l.b16 %v150
    %v655 = vunpack.c.h.b16 %v150
    %v656 = vunpack.c.l.b16 %v151
    %v657 = vunpack.c.h.b16 %v151
    %v658 = vunpack.c.l.b16 %v152
    %v659 = vunpack.c.h.b16 %v152
    %v660 = vunpack.c.l.b16 %v153
    %v661 = vunpack.c.h.b16 %v153
    %v662 = vunpack.c.l.b16 %v154
    %v663 = vunpack.c.h.b16 %v154
    %v664 = vunpack.c.l.b16 %v155
    %v665 = vunpack.c.h.b16 %v155
    %v666 = vunpack.c.l.b16 %v156
    %v667 = vunpack.c.h.b16 %v156
    %v668 = vunpack.c.l.b16 %v157
    %v669 = vunpack.c.h.b16 %v157
    %v670 = vunpack.c.l.b16 %v158
    %v671 = vunpack.c.h.b16 %v158
    %v672 = vunpack.c.l.b16 %v159
    %v673 = vunpack.c.h.b16 %v159
    %v674 = vunpack.c.l.b16 %v160
    %v675 = vunpack.c.h.b16 %v160
    %v676 = vunpack.c.l.b16 %v161
    %v677 = vunpack.c.h.b16 %v161
    %v678 = vunpack.c.l.b16 %v162
    %v679 = vunpack.c.h.b16 %v162
    %v680 = vunpack.c.l.b16 %v163
    %v681 = vunpack.c.h.b16 %v163
    %v682 = vunpack.c.l.b16 %v164
    %v683 = vunpack.c.h.b16 %v164
    %v684 = vunpack.c.l.b16 %v165
    %v685 = vunpack.c.h.b16 %v165
    %v686 = vunpack.c.l.b16 %v166
    %v687 = vunpack.c.h.b16 %v166
    %v688 = vunpack.c.l.b16 %v167
    %v689 = vunpack.c.h.b16 %v167
    %v690 = vunpack.c.l.b16 %v168
    %v691 = vunpack.c.h.b16 %v168
    %v692 = vunpack.c.l.b16 %v169
    %v693 = vunpack.c.h.b16 %v169
    %v694 = vunpack.c.l.b16 %v170
    %v695 = vunpack.c.h.b16 %v170
    %v696 = vunpack.c.l.b16 %v171
    %v697 = vunpack.c.h.b16 %v171
    %v698 = vunpack.c.l.b16 %v172
    %v699 = vunpack.c.h.b16 %v172
    %v700 = vunpack.c.l.b16 %v173
    %v701 = vunpack.c.h.b16 %v173
    %v702 = vunpack.c.l.b16 %v174
    %v703 = vunpack.c.h.b16 %v174
    %v704 = vunpack.c.l.b16 %v175
    %v705 = vunpack.c.h.b16 %v175
    %v706 = vunpack.c.l.b16 %v176
    %v707 = vunpack.c.h.b16 %v176
    %v708 = vunpack.c.l.b16 %v177
    %v709 = vunpack.c.h.b16 %v177
    %v710 = vunpack.c.l.b16 %v178
    %v711 = vunpack.c.h.b16 %v178
    %v712 = vunpack.c.l.b16 %v179
    %v713 = vunpack.c.h.b16 %v179
    %v714 = vunpack.c.l.b16 %v180
    %v715 = vunpack.c.h.b16 %v180
    %v716 = vunpack.c.l.b16 %v181
    %v717 = vunpack.c.h.b16 %v181
    %v718 = vunpack.c.l.b16 %v182
    %v719 = vunpack.c.h.b16 %v182
    %v720 = vunpack.c.l.b16 %v183
    %v721 = vunpack.c.h.b16 %v183
    %v722 = vunpack.c.l.b16 %v184
    %v723 = vunpack.c.h.b16 %v184
    %v724 = vunpack.c.l.b16 %v185
    %v725 = vunpack.c.h.b16 %v185
    %v726 = vunpack.c.l.b16 %v186
    %v727 = vunpack.c.h.b16 %v186
    %v728 = vunpack.c.l.b16 %v187
    %v729 = vunpack.c.h.b16 %v187
    %v730 = vunpack.c.l.b16 %v188
    %v731 = vunpack.c.h.b16 %v188
    %v732 = vunpack.c.l.b16 %v189
    %v733 = vunpack.c.h.b16 %v189
    %v734 = vunpack.c.l.b16 %v190
    %v735 = vunpack.c.h.b16 %v190
    %v736 = vunpack.c.l.b16 %v191
    %v737 = vunpack.c.h.b16 %v191
    %v738 = vunpack.c.l.b16 %v192
    %v739 = vunpack.c.h.b16 %v192
    %v740 = vunpack.c.l.b16 %v193
    %v741 = vunpack.c.h.b16 %v193
    %v742 = vunpack.c.l.b16 %v194
    %v743 = vunpack.c.h.b16 %v194
    %v744 = vunpack.c.l.b16 %v195
    %v745 = vunpack.c.h.b16 %v195
    %v746 = vunpack.c.l.b16 %v196
    %v747 = vunpack.c.h.b16 %v196
    %v748 = vunpack.c.l.b16 %v197
    %v749 = vunpack.c.h.b16 %v197
    %v750 = vunpack.c.l.b16 %v198
    %v751 = vunpack.c.h.b16 %v198
    %v752 = vunpack.c.l.b16 %v199
    %v753 = vunpack.c.h.b16 %v199
    %v754 = vunpack.c.l.b16 %v200
    %v755 = vunpack.c.h.b16 %v200
    %v756 = vunpack.c.l.b16 %v201
    %v757 = vunpack.c.h.b16 %v201
    %v758 = vunpack.c.l.b16 %v202
    %v759 = vunpack.c.h.b16 %v202
    %v760 = vunpack.c.l.b16 %v203
    %v761 = vunpack.c.h.b16 %v203
    %v762 = vunpack.c.l.b16 %v204
    %v763 = vunpack.c.h.b16 %v204
    %v764 = vunpack.c.l.b16 %v205
    %v765 = vunpack.c.h.b16 %v205
    %v766 = vunpack.c.l.b16 %v206
    %v767 = vunpack.c.h.b16 %v206
    %v768 = vunpack.c.l.b16 %v207
    %v769 = vunpack.c.h.b16 %v207
    %v770 = vunpack.c.l.b16 %v208
    %v771 = vunpack.c.h.b16 %v208
    %v772 = vunpack.c.l.b16 %v209
    %v773 = vunpack.c.h.b16 %v209
    %v774 = vunpack.c.l.b16 %v210
    %v775 = vunpack.c.h.b16 %v210
    %v776 = vunpack.c.l.b16 %v211
    %v777 = vunpack.c.h.b16 %v211
    %v778 = vunpack.c.l.b16 %v212
    %v779 = vunpack.c.h.b16 %v212
    %v780 = vunpack.c.l.b16 %v213
    %v781 = vunpack.c.h.b16 %v213
    %v782 = vunpack.c.l.b16 %v214
    %v783 = vunpack.c.h.b16 %v214
    %v784 = vunpack.c.l.b16 %v215
    %v785 = vunpack.c.h.b16 %v215
    %v786 = vunpack.c.l.b16 %v216
    %v787 = vunpack.c.h.b16 %v216
    %v788 = vunpack.c.l.b16 %v217
    %v789 = vunpack.c.h.b16 %v217
    %v790 = vunpack.c.l.b16 %v218
    %v791 = vunpack.c.h.b16 %v218
    %v792 = vunpack.c.l.b16 %v219
    %v793 = vunpack.c.h.b16 %v219
    %v794 = vunpack.c.l.b16 %v220
    %v795 = vunpack.c.h.b16 %v220
    %v796 = vunpack.c.l.b16 %v221
    %v797 = vunpack.c.h.b16 %v221
    %v798 = vunpack.c.l.b16 %v222
    %v799 = vunpack.c.h.b16 %v222
    %v800 = vunpack.c.l.b16 %v223
    %v801 = vunpack.c.h.b16 %v223
    %v802 = vunpack.c.l.b16 %v224
    %v803 = vunpack.c.h.b16 %v224
    %v804 = vunpack.c.l.b16 %v225
    %v805 = vunpack.c.h.b16 %v225
    %v806 = vunpack.c.l.b16 %v226
    %v807 = vunpack.c.h.b16 %v226
    %v808 = vunpack.c.l.b16 %v227
    %v809 = vunpack.c.h.b16 %v227
    %v810 = vunpack.c.l.b16 %v228
    %v811 = vunpack.c.h.b16 %v228
    %v812 = vunpack.c.l.b16 %v229
    %v813 = vunpack.c.h.b16 %v229
    %v814 = vunpack.c.l.b16 %v230
    %v815 = vunpack.c.h.b16 %v230
    %v816 = vunpack.c.l.b16 %v231
    %v817 = vunpack.c.h.b16 %v231
    %v818 = vunpack.c.l.b16 %v232
    %v819 = vunpack.c.h.b16 %v232
    %v820 = vunpack.c.l.b16 %v233
    %v821 = vunpack.c.h.b16 %v233
    %v822 = vunpack.c.l.b16 %v234
    %v823 = vunpack.c.h.b16 %v234
    %v824 = vunpack.c.l.b16 %v235
    %v825 = vunpack.c.h.b16 %v235
    %v826 = vunpack.c.l.b16 %v236
    %v827 = vunpack.c.h.b16 %v236
    %v828 = vunpack.c.l.b16 %v237
    %v829 = vunpack.c.h.b16 %v237
    %v830 = vunpack.c.l.b16 %v238
    %v831 = vunpack.c.h.b16 %v238
    %v832 = vunpack.c.l.b16 %v239
    %v833 = vunpack.c.h.b16 %v239
    %v834 = vunpack.c.l.b16 %v240
    %v835 = vunpack.c.h.b16 %v240
    %v836 = vunpack.c.l.b16 %v241
    %v837 = vunpack.c.h.b16 %v241
    %v838 = vunpack.c.l.b16 %v242
    %v839 = vunpack.c.h.b16 %v242
    %v840 = vunpack.c.l.b16 %v243
    %v841 = vunpack.c.h.b16 %v243
    %v842 = vunpack.c.l.b16 %v244
    %v843 = vunpack.c.h.b16 %v244
    %v844 = vunpack.c.l.b16 %v245
    %v845 = vunpack.c.h.b16 %v245
    %v846 = vunpack.c.l.b16 %v246
    %v847 = vunpack.c.h.b16 %v246
    %v848 = vunpack.c.l.b16 %v247
    %v849 = vunpack.c.h.b16 %v247
    %v850 = vunpack.c.l.b16 %v248
    %v851 = vunpack.c.h.b16 %v248
    %v852 = vunpack.c.l.b16 %v249
    %v853 = vunpack.c.h.b16 %v249
    %v854 = vunpack.c.l.b16 %v250
    %v855 = vunpack.c.h.b16 %v250
    %v856 = vunpack.c.l.b16 %v251
    %v857 = vunpack.c.h.b16 %v251
    %v858 = vunpack.c.l.b16 %v252
    %v859 = vunpack.c.h.b16 %v252
    %v860 = vpack.c.b16 %v480, %v476
    %v861 = vpack.c.b16 %v481, %v477
    %v862 = vpack.c.b16 %v482, %v478
    %v863 = vpack.c.b16 %v483, %v479
    %v864 = vpack.c.b16 %v488, %v484
    %v865 = vpack.c.b16 %v489, %v485
    %v866 = vpack.c.b16 %v490, %v486
    %v867 = vpack.c.b16 %v491, %v487
    %v868 = vpack.c.b16 %v496, %v492
    %v869 = vpack.c.b16 %v497, %v493
    %v870 = vpack.c.b16 %v498, %v494
    %v871 = vpack.c.b16 %v499, %v495
    %v872 = vpack.c.b16 %v504, %v500
    %v873 = vpack.c.b16 %v505, %v501
    %v874 = vpack.c.b16 %v506, %v502
    %v875 = vpack.c.b16 %v507, %v503
    %v876 = vpack.c.b16 %v512, %v508
    %v877 = vpack.c.b16 %v513, %v509
    %v878 = vpack.c.b16 %v514, %v510
    %v879 = vpack.c.b16 %v515, %v511
    %v880 = vpack.c.b16 %v520, %v516
    %v881 = vpack.c.b16 %v521, %v517
    %v882 = vpack.c.b16 %v522, %v518
    %v883 = vpack.c.b16 %v523, %v519
    %v884 = vpack.c.b16 %v528, %v524
    %v885 = vpack.c.b16 %v529, %v525
    %v886 = vpack.c.b16 %v530, %v526
    %v887 = vpack.c.b16 %v531, %v527
    %v888 = vpack.c.b16 %v536, %v532
    %v889 = vpack.c.b16 %v537, %v533
    %v890 = vpack.c.b16 %v538, %v534
    %v891 = vpack.c.b16 %v539, %v535
    %v892 = vpack.c.b16 %v544, %v540
    %v893 = vpack.c.b16 %v545, %v541
    %v894 = vpack.c.b16 %v546, %v542
    %v895 = vpack.c.b16 %v547, %v543
    %v896 = vpack.c.b16 %v552, %v548
    %v897 = vpack.c.b16 %v553, %v549
    %v898 = vpack.c.b16 %v554, %v550
    %v899 = vpack.c.b16 %v555, %v551
    %v900 = vpack.c.b16 %v560, %v556
    %v901 = vpack.c.b16 %v561, %v557
    %v902 = vpack.c.b16 %v562, %v558
    %v903 = vpack.c.b16 %v563, %v559
    %v904 = vpack.c.b16 %v568, %v564
    %v905 = vpack.c.b16 %v569, %v565
    %v906 = vpack.c.b16 %v570, %v566
    %v907 = vpack.c.b16 %v571, %v567
    %v908 = vpack.c.b16 %v576, %v572
    %v909 = vpack.c.b16 %v577, %v573
    %v910 = vpack.c.b16 %v578, %v574
    %v911 = vpack.c.b16 %v579, %v575
    %v912 = vpack.c.b16 %v584, %v580
    %v913 = vpack.c.b16 %v585, %v581
    %v914 = vpack.c.b16 %v586, %v582
    %v915 = vpack.c.b16 %v587, %v583
    %v916 = vpack.c.b16 %v592, %v588
    %v917 = vpack.c.b16 %v593, %v589
    %v918 = vpack.c.b16 %v594, %v590
    %v919 = vpack.c.b16 %v595, %v591
    %v920 = vpack.c.b16 %v600, %v596
    %v921 = vpack.c.b16 %v601, %v597
    %v922 = vpack.c.b16 %v602, %v598
    %v923 = vpack.c.b16 %v603, %v599
    %v924 = vpack.c.b16 %v608, %v604
    %v925 = vpack.c.b16 %v609, %v605
    %v926 = vpack.c.b16 %v610, %v606
    %v927 = vpack.c.b16 %v611, %v607
    %v928 = vpack.c.b16 %v616, %v612
    %v929 = vpack.c.b16 %v617, %v613
    %v930 = vpack.c.b16 %v618, %v614
    %v931 = vpack.c.b16 %v619, %v615
    %v932 = vpack.c.b16 %v624, %v620
    %v933 = vpack.c.b16 %v625, %v621
    %v934 = vpack.c.b16 %v626, %v622
    %v935 = vpack.c.b16 %v627, %v623
    %v936 = vpack.c.b16 %v632, %v628
    %v937 = vpack.c.b16 %v633, %v629
    %v938 = vpack.c.b16 %v634, %v630
    %v939 = vpack.c.b16 %v635, %v631
    %v940 = vpack.c.b16 %v640, %v636
    %v941 = vpack.c.b16 %v641, %v637
    %v942 = vpack.c.b16 %v642, %v638
    %v943 = vpack.c.b16 %v643, %v639
    %v944 = vpack.c.b16 %v648, %v644
    %v945 = vpack.c.b16 %v649, %v645
    %v946 = vpack.c.b16 %v650, %v646
    %v947 = vpack.c.b16 %v651, %v647
    %v948 = vpack.c.b16 %v656, %v652
    %v949 = vpack.c.b16 %v657, %v653
    %v950 = vpack.c.b16 %v658, %v654
    %v951 = vpack.c.b16 %v659, %v655
    %v952 = vpack.c.b16 %v664, %v660
    %v953 = vpack.c.b16 %v665, %v661
    %v954 = vpack.c.b16 %v666, %v662
    %v955 = vpack.c.b16 %v667, %v663
    %v956 = vpack.c.b16 %v672, %v668
    %v957 = vpack.c.b16 %v673, %v669
    %v958 = vpack.c.b16 %v674, %v670
    %v959 = vpack.c.b16 %v675, %v671
    %v960 = vpack.c.b16 %v680, %v676
    %v961 = vpack.c.b16 %v681, %v677
    %v962 = vpack.c.b16 %v682, %v678
    %v963 = vpack.c.b16 %v683, %v679
    %v964 = vpack.c.b16 %v688, %v684
    %v965 = vpack.c.b16 %v689, %v685
    %v966 = vpack.c.b16 %v690, %v686
    %v967 = vpack.c.b16 %v691, %v687
    %v968 = vpack.c.b16 %v696, %v692
    %v969 = vpack.c.b16 %v697, %v693
    %v970 = vpack.c.b16 %v698, %v694
    %v971 = vpack.c.b16 %v699, %v695
    %v972 = vpack.c.b16 %v704, %v700
    %v973 = vpack.c.b16 %v705, %v701
    %v974 = vpack.c.b16 %v706, %v702
    %v975 = vpack.c.b16 %v707, %v703
    %v976 = vpack.c.b16 %v712, %v708
    %v977 = vpack.c.b16 %v713, %v709
    %v978 = vpack.c.b16 %v714, %v710
    %v979 = vpack.c.b16 %v715, %v711
    %v980 = vpack.c.b16 %v720, %v716
    %v981 = vpack.c.b16 %v721, %v717
    %v982 = vpack.c.b16 %v722, %v718
    %v983 = vpack.c.b16 %v723, %v719
    %v984 = vpack.c.b16 %v728, %v724
    %v985 = vpack.c.b16 %v729, %v725
    %v986 = vpack.c.b16 %v730, %v726
    %v987 = vpack.c.b16 %v731, %v727
    %v988 = vpack.c.b16 %v736, %v732
    %v989 = vpack.c.b16 %v737, %v733
    %v990 = vpack.c.b16 %v738, %v734
    %v991 = vpack.c.b16 %v739, %v735
    %v992 = vpack.c.b16 %v744, %v740
    %v993 = vpack.c.b16 %v745, %v741
    %v994 = vpack.c.b16 %v746, %v742
    %v995 = vpack.c.b16 %v747, %v743
    %v996 = vpack.c.b16 %v752, %v748
    %v997 = vpack.c.b16 %v753, %v749
    %v998 = vpack.c.b16 %v754, %v750
    %v999 = vpack.c.b16 %v755, %v751
    %v1000 = vpack.c.b16 %v760, %v756
    %v1001 = vpack.c.b16 %v761, %v757
    %v1002 = vpack.c.b16 %v762, %v758
    %v1003 = vpack.c.b16 %v763, %v759
    %v1004 = vpack.c.b16 %v768, %v764
    %v1005 = vpack.c.b16 %v769, %v765
    %v1006 = vpack.c.b16 %v770, %v766
    %v1007 = vpack.c.b16 %v771, %v767
    %v1008 = vpack.c.b16 %v776, %v772
    %v1009 = vpack.c.b16 %v777, %v773
    %v1010 = vpack.c.b16 %v778, %v774
    %v1011 = vpack.c.b16 %v779, %v775
    %v1012 = vpack.c.b16 %v784, %v780
    %v1013 = vpack.c.b16 %v785, %v781
    %v1014 = vpack.c.b16 %v786, %v782
    %v1015 = vpack.c.b16 %v787, %v783
    %v1016 = vpack.c.b16 %v792, %v788
    %v1017 = vpack.c.b16 %v793, %v789
    %v1018 = vpack.c.b16 %v794, %v790
    %v1019 = vpack.c.b16 %v795, %v791
    %v1020 = vpack.c.b16 %v800, %v796
    %v1021 = vpack.c.b16 %v801, %v797
    %v1022 = vpack.c.b16 %v802, %v798
    %v1023 = vpack.c.b16 %v803, %v799
    %v1024 = vpack.c.b16 %v808, %v804
    %v1025 = vpack.c.b16 %v809, %v805
    %v1026 = vpack.c.b16 %v810, %v806
    %v1027 = vpack.c.b16 %v811, %v807
    %v1028 = vpack.c.b16 %v816, %v812
    %v1029 = vpack.c.b16 %v817, %v813
    %v1030 = vpack.c.b16 %v818, %v814
    %v1031 = vpack.c.b16 %v819, %v815
    %v1032 = vpack.c.b16 %v824, %v820
    %v1033 = vpack.c.b16 %v825, %v821
    %v1034 = vpack.c.b16 %v826, %v822
    %v1035 = vpack.c.b16 %v827, %v823
    %v1036 = vpack.c.b16 %v832, %v828
    %v1037 = vpack.c.b16 %v833, %v829
    %v1038 = vpack.c.b16 %v834, %v830
    %v1039 = vpack.c.b16 %v835, %v831
    %v1040 = vpack.c.b16 %v840, %v836
    %v1041 = vpack.c.b16 %v841, %v837
    %v1042 = vpack.c.b16 %v842, %v838
    %v1043 = vpack.c.b16 %v843, %v839
    %v1044 = vpack.c.b16 %v848, %v844
    %v1045 = vpack.c.b16 %v849, %v845
    %v1046 = vpack.c.b16 %v850, %v846
    %v1047 = vpack.c.b16 %v851, %v847
    %v1048 = vpack.c.b16 %v856, %v852
    %v1049 = vpack.c.b16 %v857, %v853
    %v1050 = vpack.c.b16 %v858, %v854
    %v1051 = vpack.c.b16 %v859, %v855
    %1244 = vmatpush.bf16.msra.mxu0 %v888
    %1245 = vmatpush.bf16.msra.mxu0 %v884
    %1246 = vmatpush.bf16.msra.mxu0 %v880
    %1247 = vmatpush.bf16.msra.mxu0 %v876
    %1248 = vmatpush.bf16.msra.mxu0 %v872
    %1249 = vmatpush.bf16.msra.mxu0 %v868
    %1250 = vmatpush.bf16.msra.mxu0 %v864
    %1251 = vmatpush.bf16.msra.mxu0 %v860
    %1252 = vmatmul.bf16.gmra.mxu0 %v272
    %v1253 = vpop.f32.mrf.mxu0
    %v1254 = vadd.f32 %v255, %v1253
    %v1255 = vpop.f32.mrf.mxu0
    %1256 = vdwg.mxu0
    %1257 = vmatpush.bf16.msra.mxu0 %v920
    %1258 = vmatpush.bf16.msra.mxu0 %v916
    %1259 = vmatpush.bf16.msra.mxu0 %v912
    %1260 = vmatpush.bf16.msra.mxu0 %v908
    %1261 = vmatpush.bf16.msra.mxu0 %v904
    %1262 = vmatpush.bf16.msra.mxu0 %v900
    %1263 = vmatpush.bf16.msra.mxu0 %v896
    %1264 = vmatpush.bf16.msra.mxu0 %v892
    %1265 = vmatmul.bf16.gmra.mxu0 %v273
    %v1266 = vpop.f32.mrf.mxu0
    %v1267 = vadd.f32 %v1254, %v1266
    %v1268 = vpop.f32.mrf.mxu0
    %1269 = vdwg.mxu0
    %1270 = vmatpush.bf16.msra.mxu0 %v952
    %1271 = vmatpush.bf16.msra.mxu0 %v948
    %1272 = vmatpush.bf16.msra.mxu0 %v944
    %1273 = vmatpush.bf16.msra.mxu0 %v940
    %1274 = vmatpush.bf16.msra.mxu0 %v936
    %1275 = vmatpush.bf16.msra.mxu0 %v932
    %1276 = vmatpush.bf16.msra.mxu0 %v928
    %1277 = vmatpush.bf16.msra.mxu0 %v924
    %1278 = vmatmul.bf16.gmra.mxu0 %v274
    %v1279 = vpop.f32.mrf.mxu0
    %v1280 = vadd.f32 %v1267, %v1279
    %v1281 = vpop.f32.mrf.mxu0
    %1282 = vdwg.mxu0
    %1283 = vmatpush.bf16.msra.mxu0 %v984
    %1284 = vmatpush.bf16.msra.mxu0 %v980
    %1285 = vmatpush.bf16.msra.mxu0 %v976
    %1286 = vmatpush.bf16.msra.mxu0 %v972
    %1287 = vmatpush.bf16.msra.mxu0 %v968
    %1288 = vmatpush.bf16.msra.mxu0 %v964
    %1289 = vmatpush.bf16.msra.mxu0 %v960
    %1290 = vmatpush.bf16.msra.mxu0 %v956
    %1291 = vmatmul.bf16.gmra.mxu0 %v275
    %v1292 = vpop.f32.mrf.mxu0
    %v1293 = vadd.f32 %v1280, %v1292
    %v1294 = vpop.f32.mrf.mxu0
    %1295 = vdwg.mxu0
    %1296 = vmatpush.bf16.msra.mxu0 %v1016
    %1297 = vmatpush.bf16.msra.mxu0 %v1012
    %1298 = vmatpush.bf16.msra.mxu0 %v1008
    %1299 = vmatpush.bf16.msra.mxu0 %v1004
    %1300 = vmatpush.bf16.msra.mxu0 %v1000
    %1301 = vmatpush.bf16.msra.mxu0 %v996
    %1302 = vmatpush.bf16.msra.mxu0 %v992
    %1303 = vmatpush.bf16.msra.mxu0 %v988
    %1304 = vmatmul.bf16.gmra.mxu0 %v276
    %v1305 = vpop.f32.mrf.mxu0
    %v1306 = vadd.f32 %v1293, %v1305
    %v1307 = vpop.f32.mrf.mxu0
    %1308 = vdwg.mxu0
    %1309 = vmatpush.bf16.msra.mxu0 %v1048
    %1310 = vmatpush.bf16.msra.mxu0 %v1044
    %1311 = vmatpush.bf16.msra.mxu0 %v1040
    %1312 = vmatpush.bf16.msra.mxu0 %v1036
    %1313 = vmatpush.bf16.msra.mxu0 %v1032
    %1314 = vmatpush.bf16.msra.mxu0 %v1028
    %1315 = vmatpush.bf16.msra.mxu0 %v1024
    %1316 = vmatpush.bf16.msra.mxu0 %v1020
    %1317 = vmatmul.bf16.gmra.mxu0 %v277
    %v1318 = vpop.f32.mrf.mxu0
    %v1319 = vadd.f32 %v1306, %v1318
    %v1320 = vpop.f32.mrf.mxu0
    %1321 = vdwg.mxu0
    %1322 = vmatpush.bf16.msra.mxu0 %v889
    %1323 = vmatpush.bf16.msra.mxu0 %v885
    %1324 = vmatpush.bf16.msra.mxu0 %v881
    %1325 = vmatpush.bf16.msra.mxu0 %v877
    %1326 = vmatpush.bf16.msra.mxu0 %v873
    %1327 = vmatpush.bf16.msra.mxu0 %v869
    %1328 = vmatpush.bf16.msra.mxu0 %v865
    %1329 = vmatpush.bf16.msra.mxu0 %v861
    %1330 = vmatmul.bf16.gmra.mxu0 %v272
    %v1331 = vpop.f32.mrf.mxu0
    %v1332 = vadd.f32 %v256, %v1331
    %v1333 = vpop.f32.mrf.mxu0
    %1334 = vdwg.mxu0
    %1335 = vmatpush.bf16.msra.mxu0 %v921
    %1336 = vmatpush.bf16.msra.mxu0 %v917
    %1337 = vmatpush.bf16.msra.mxu0 %v913
    %1338 = vmatpush.bf16.msra.mxu0 %v909
    %1339 = vmatpush.bf16.msra.mxu0 %v905
    %1340 = vmatpush.bf16.msra.mxu0 %v901
    %1341 = vmatpush.bf16.msra.mxu0 %v897
    %1342 = vmatpush.bf16.msra.mxu0 %v893
    %1343 = vmatmul.bf16.gmra.mxu0 %v273
    %v1344 = vpop.f32.mrf.mxu0
    %v1345 = vadd.f32 %v1332, %v1344
    %v1346 = vpop.f32.mrf.mxu0
    %1347 = vdwg.mxu0
    %1348 = vmatpush.bf16.msra.mxu0 %v953
    %1349 = vmatpush.bf16.msra.mxu0 %v949
    %1350 = vmatpush.bf16.msra.mxu0 %v945
    %1351 = vmatpush.bf16.msra.mxu0 %v941
    %1352 = vmatpush.bf16.msra.mxu0 %v937
    %1353 = vmatpush.bf16.msra.mxu0 %v933
    %1354 = vmatpush.bf16.msra.mxu0 %v929
    %1355 = vmatpush.bf16.msra.mxu0 %v925
    %1356 = vmatmul.bf16.gmra.mxu0 %v274
    %v1357 = vpop.f32.mrf.mxu0
    %v1358 = vadd.f32 %v1345, %v1357
    %v1359 = vpop.f32.mrf.mxu0
    %1360 = vdwg.mxu0
    %1361 = vmatpush.bf16.msra.mxu0 %v985
    %1362 = vmatpush.bf16.msra.mxu0 %v981
    %1363 = vmatpush.bf16.msra.mxu0 %v977
    %1364 = vmatpush.bf16.msra.mxu0 %v973
    %1365 = vmatpush.bf16.msra.mxu0 %v969
    %1366 = vmatpush.bf16.msra.mxu0 %v965
    %1367 = vmatpush.bf16.msra.mxu0 %v961
    %1368 = vmatpush.bf16.msra.mxu0 %v957
    %1369 = vmatmul.bf16.gmra.mxu0 %v275
    %v1370 = vpop.f32.mrf.mxu0
    %v1371 = vadd.f32 %v1358, %v1370
    %v1372 = vpop.f32.mrf.mxu0
    %1373 = vdwg.mxu0
    %1374 = vmatpush.bf16.msra.mxu0 %v1017
    %1375 = vmatpush.bf16.msra.mxu0 %v1013
    %1376 = vmatpush.bf16.msra.mxu0 %v1009
    %1377 = vmatpush.bf16.msra.mxu0 %v1005
    %1378 = vmatpush.bf16.msra.mxu0 %v1001
    %1379 = vmatpush.bf16.msra.mxu0 %v997
    %1380 = vmatpush.bf16.msra.mxu0 %v993
    %1381 = vmatpush.bf16.msra.mxu0 %v989
    %1382 = vmatmul.bf16.gmra.mxu0 %v276
    %v1383 = vpop.f32.mrf.mxu0
    %v1384 = vadd.f32 %v1371, %v1383
    %v1385 = vpop.f32.mrf.mxu0
    %1386 = vdwg.mxu0
    %1387 = vmatpush.bf16.msra.mxu0 %v1049
    %1388 = vmatpush.bf16.msra.mxu0 %v1045
    %1389 = vmatpush.bf16.msra.mxu0 %v1041
    %1390 = vmatpush.bf16.msra.mxu0 %v1037
    %1391 = vmatpush.bf16.msra.mxu0 %v1033
    %1392 = vmatpush.bf16.msra.mxu0 %v1029
    %1393 = vmatpush.bf16.msra.mxu0 %v1025
    %1394 = vmatpush.bf16.msra.mxu0 %v1021
    %1395 = vmatmul.bf16.gmra.mxu0 %v277
    %v1396 = vpop.f32.mrf.mxu0
    %v1397 = vadd.f32 %v1384, %v1396
    %v1398 = vpop.f32.mrf.mxu0
    %1399 = vdwg.mxu0
    %1400 = vmatpush.bf16.msra.mxu0 %v890
    %1401 = vmatpush.bf16.msra.mxu0 %v886
    %1402 = vmatpush.bf16.msra.mxu0 %v882
    %1403 = vmatpush.bf16.msra.mxu0 %v878
    %1404 = vmatpush.bf16.msra.mxu0 %v874
    %1405 = vmatpush.bf16.msra.mxu0 %v870
    %1406 = vmatpush.bf16.msra.mxu0 %v866
    %1407 = vmatpush.bf16.msra.mxu0 %v862
    %1408 = vmatmul.bf16.gmra.mxu0 %v272
    %v1409 = vpop.f32.mrf.mxu0
    %v1410 = vadd.f32 %v257, %v1409
    %v1411 = vpop.f32.mrf.mxu0
    %1412 = vdwg.mxu0
    %1413 = vmatpush.bf16.msra.mxu0 %v922
    %1414 = vmatpush.bf16.msra.mxu0 %v918
    %1415 = vmatpush.bf16.msra.mxu0 %v914
    %1416 = vmatpush.bf16.msra.mxu0 %v910
    %1417 = vmatpush.bf16.msra.mxu0 %v906
    %1418 = vmatpush.bf16.msra.mxu0 %v902
    %1419 = vmatpush.bf16.msra.mxu0 %v898
    %1420 = vmatpush.bf16.msra.mxu0 %v894
    %1421 = vmatmul.bf16.gmra.mxu0 %v273
    %v1422 = vpop.f32.mrf.mxu0
    %v1423 = vadd.f32 %v1410, %v1422
    %v1424 = vpop.f32.mrf.mxu0
    %1425 = vdwg.mxu0
    %1426 = vmatpush.bf16.msra.mxu0 %v954
    %1427 = vmatpush.bf16.msra.mxu0 %v950
    %1428 = vmatpush.bf16.msra.mxu0 %v946
    %1429 = vmatpush.bf16.msra.mxu0 %v942
    %1430 = vmatpush.bf16.msra.mxu0 %v938
    %1431 = vmatpush.bf16.msra.mxu0 %v934
    %1432 = vmatpush.bf16.msra.mxu0 %v930
    %1433 = vmatpush.bf16.msra.mxu0 %v926
    %1434 = vmatmul.bf16.gmra.mxu0 %v274
    %v1435 = vpop.f32.mrf.mxu0
    %v1436 = vadd.f32 %v1423, %v1435
    %v1437 = vpop.f32.mrf.mxu0
    %1438 = vdwg.mxu0
    %1439 = vmatpush.bf16.msra.mxu0 %v986
    %1440 = vmatpush.bf16.msra.mxu0 %v982
    %1441 = vmatpush.bf16.msra.mxu0 %v978
    %1442 = vmatpush.bf16.msra.mxu0 %v974
    %1443 = vmatpush.bf16.msra.mxu0 %v970
    %1444 = vmatpush.bf16.msra.mxu0 %v966
    %1445 = vmatpush.bf16.msra.mxu0 %v962
    %1446 = vmatpush.bf16.msra.mxu0 %v958
    %1447 = vmatmul.bf16.gmra.mxu0 %v275
    %v1448 = vpop.f32.mrf.mxu0
    %v1449 = vadd.f32 %v1436, %v1448
    %v1450 = vpop.f32.mrf.mxu0
    %1451 = vdwg.mxu0
    %1452 = vmatpush.bf16.msra.mxu0 %v1018
    %1453 = vmatpush.bf16.msra.mxu0 %v1014
    %1454 = vmatpush.bf16.msra.mxu0 %v1010
    %1455 = vmatpush.bf16.msra.mxu0 %v1006
    %1456 = vmatpush.bf16.msra.mxu0 %v1002
    %1457 = vmatpush.bf16.msra.mxu0 %v998
    %1458 = vmatpush.bf16.msra.mxu0 %v994
    %1459 = vmatpush.bf16.msra.mxu0 %v990
    %1460 = vmatmul.bf16.gmra.mxu0 %v276
    %v1461 = vpop.f32.mrf.mxu0
    %v1462 = vadd.f32 %v1449, %v1461
    %v1463 = vpop.f32.mrf.mxu0
    %1464 = vdwg.mxu0
    %1465 = vmatpush.bf16.msra.mxu0 %v1050
    %1466 = vmatpush.bf16.msra.mxu0 %v1046
    %1467 = vmatpush.bf16.msra.mxu0 %v1042
    %1468 = vmatpush.bf16.msra.mxu0 %v1038
    %1469 = vmatpush.bf16.msra.mxu0 %v1034
    %1470 = vmatpush.bf16.msra.mxu0 %v1030
    %1471 = vmatpush.bf16.msra.mxu0 %v1026
    %1472 = vmatpush.bf16.msra.mxu0 %v1022
    %1473 = vmatmul.bf16.gmra.mxu0 %v277
    %v1474 = vpop.f32.mrf.mxu0
    %v1475 = vadd.f32 %v1462, %v1474
    %v1476 = vpop.f32.mrf.mxu0
    %1477 = vdwg.mxu0
    %1478 = vmatpush.bf16.msra.mxu0 %v891
    %1479 = vmatpush.bf16.msra.mxu0 %v887
    %1480 = vmatpush.bf16.msra.mxu0 %v883
    %1481 = vmatpush.bf16.msra.mxu0 %v879
    %1482 = vmatpush.bf16.msra.mxu0 %v875
    %1483 = vmatpush.bf16.msra.mxu0 %v871
    %1484 = vmatpush.bf16.msra.mxu0 %v867
    %1485 = vmatpush.bf16.msra.mxu0 %v863
    %1486 = vmatmul.bf16.gmra.mxu0 %v272
    %v1487 = vpop.f32.mrf.mxu0
    %v1488 = vadd.f32 %v258, %v1487
    %v1489 = vpop.f32.mrf.mxu0
    %1490 = vdwg.mxu0
    %1491 = vmatpush.bf16.msra.mxu0 %v923
    %1492 = vmatpush.bf16.msra.mxu0 %v919
    %1493 = vmatpush.bf16.msra.mxu0 %v915
    %1494 = vmatpush.bf16.msra.mxu0 %v911
    %1495 = vmatpush.bf16.msra.mxu0 %v907
    %1496 = vmatpush.bf16.msra.mxu0 %v903
    %1497 = vmatpush.bf16.msra.mxu0 %v899
    %1498 = vmatpush.bf16.msra.mxu0 %v895
    %1499 = vmatmul.bf16.gmra.mxu0 %v273
    %v1500 = vpop.f32.mrf.mxu0
    %v1501 = vadd.f32 %v1488, %v1500
    %v1502 = vpop.f32.mrf.mxu0
    %1503 = vdwg.mxu0
    %1504 = vmatpush.bf16.msra.mxu0 %v955
    %1505 = vmatpush.bf16.msra.mxu0 %v951
    %1506 = vmatpush.bf16.msra.mxu0 %v947
    %1507 = vmatpush.bf16.msra.mxu0 %v943
    %1508 = vmatpush.bf16.msra.mxu0 %v939
    %1509 = vmatpush.bf16.msra.mxu0 %v935
    %1510 = vmatpush.bf16.msra.mxu0 %v931
    %1511 = vmatpush.bf16.msra.mxu0 %v927
    %1512 = vmatmul.bf16.gmra.mxu0 %v274
    %v1513 = vpop.f32.mrf.mxu0
    %v1514 = vadd.f32 %v1501, %v1513
    %v1515 = vpop.f32.mrf.mxu0
    %1516 = vdwg.mxu0
    %1517 = vmatpush.bf16.msra.mxu0 %v987
    %1518 = vmatpush.bf16.msra.mxu0 %v983
    %1519 = vmatpush.bf16.msra.mxu0 %v979
    %1520 = vmatpush.bf16.msra.mxu0 %v975
    %1521 = vmatpush.bf16.msra.mxu0 %v971
    %1522 = vmatpush.bf16.msra.mxu0 %v967
    %1523 = vmatpush.bf16.msra.mxu0 %v963
    %1524 = vmatpush.bf16.msra.mxu0 %v959
    %1525 = vmatmul.bf16.gmra.mxu0 %v275
    %v1526 = vpop.f32.mrf.mxu0
    %v1527 = vadd.f32 %v1514, %v1526
    %v1528 = vpop.f32.mrf.mxu0
    %1529 = vdwg.mxu0
    %1530 = vmatpush.bf16.msra.mxu0 %v1019
    %1531 = vmatpush.bf16.msra.mxu0 %v1015
    %1532 = vmatpush.bf16.msra.mxu0 %v1011
    %1533 = vmatpush.bf16.msra.mxu0 %v1007
    %1534 = vmatpush.bf16.msra.mxu0 %v1003
    %1535 = vmatpush.bf16.msra.mxu0 %v999
    %1536 = vmatpush.bf16.msra.mxu0 %v995
    %1537 = vmatpush.bf16.msra.mxu0 %v991
    %1538 = vmatmul.bf16.gmra.mxu0 %v276
    %v1539 = vpop.f32.mrf.mxu0
    %v1540 = vadd.f32 %v1527, %v1539
    %v1541 = vpop.f32.mrf.mxu0
    %1542 = vdwg.mxu0
    %1543 = vmatpush.bf16.msra.mxu0 %v1051
    %1544 = vmatpush.bf16.msra.mxu0 %v1047
    %1545 = vmatpush.bf16.msra.mxu0 %v1043
    %1546 = vmatpush.bf16.msra.mxu0 %v1039
    %1547 = vmatpush.bf16.msra.mxu0 %v1035
    %1548 = vmatpush.bf16.msra.mxu0 %v1031
    %1549 = vmatpush.bf16.msra.mxu0 %v1027
    %1550 = vmatpush.bf16.msra.mxu0 %v1023
    %1551 = vmatmul.bf16.gmra.mxu0 %v277
    %v1552 = vpop.f32.mrf.mxu0
    %v1553 = vadd.f32 %v1540, %v1552
    %v1554 = vpop.f32.mrf.mxu0
    %1555 = vdwg.mxu0
    %v1556 = vtanh.pop %v1319
    %v1557 = vtanh.pop %v1397
    %v1558 = vtanh.pop %v1475
    %v1559 = vtanh.pop %v1553
    %v1560 = vmul.f32 %v1556, %v1556
    %v1561 = vmul.f32 %v1557, %v1557
    %v1562 = vmul.f32 %v1558, %v1558
    %v1563 = vmul.f32 %v1559, %v1559
    %v1564 = vadd.f32 %v1560, %v1561
    %v1565 = vadd.f32 %v1564, %v1562
    %v1566 = vadd.f32 %v1565, %v1563
    %1567 = vadd.xlane.f32.xlu0 %v1566
    %v1568 = vpop.xlane.xlu0 %1567
    %v1569 = vmax.f32 %v1568, 1e-24
    %v1570 = vrsqrt.pop %v1569
    %v1571 = vmul.f32 %v1570, %v1569
    %v1572 = vmul.f32 %v1571, %v1570
    %v1573 = vmul.f32 0.5, %v1572
    %v1574 = vsub.f32 1.5, %v1573
    %v1575 = vmul.f32 %v1570, %v1574
    %vm1576 = vweird.f32 %v1569
    %vm1577 = vweird.f32 %v1570
    %vm1578 = vmor %vm1576, %vm1577
    %v1579 = vsel %vm1578, %v1570, %v1575
    %v1580 = vmul.f32 %v1556, %v1579
    %v1581 = vmul.f32 %v1557, %v1579
    %v1582 = vmul.f32 %v1558, %v1579
    %v1583 = vmul.f32 %v1559, %v1579
    %v1584 = vpack.c.bf16 %v1581, %v1580
    %v1585 = vpack.c.bf16 %v1583, %v1582
    %1586 = vst [vmem:[#allocation8] sm:$0xff] %v1584
    %1587 = vst [vmem:[#allocation8 + $0x8] sm:$0xff] %v1585
    // Predicated region
    $region26: #{tpu_custom_call.1} parent=1 // pred_check
      _
    $region27: #{tpu_custom_call.1} parent=1 // pred_check_branch
      %1589 = sbr.rel (0) target = $region29
    $region28: #{tpu_custom_call.1} parent=1 // pred_region
      %1591 = vsyncadd [#allocation4], 0
      %s1593 = sshll.u32 [#allocation8], 4
      %s1594 = int_to_ptr.vmem [resolvable:$true] %s1593
      %s1595 = sshll.u32 %s3, 4
      %s1596 = int_to_ptr.hbm [resolvable:$true] %s1595
      %1598 = dma.vmem_to_hbm [thread:$0]  %s1594, 256, %s1596, [#allocation4]
    $region29: #{tpu_custom_call.1} parent=1 // pred_fallthru
      _
    // Predicated region
    $region30: #{tpu_custom_call.1} parent=1 // pred_check
      _
    $region31: #{tpu_custom_call.1} parent=1 // pred_check_branch
      %1600 = sbr.rel (0) target = $region33
    $region32: #{tpu_custom_call.1} parent=1 // pred_region
      %1602 = dma.done [#allocation4], 256
    $region33: #{tpu_custom_call.1} parent=1 // pred_fallthru
      _
    %1603 = vsyncpa [#allocation3], 1
    %1604 = vsyncpa [#allocation6], 1
    %1605 = vsyncpa [#allocation4], 1

</llo_original>
